<compile_context>
chip_gen: v5e
topology: v5e:2x2
jax: 0.10.0
libtpu: 0.0.40
codegen_flags: <defaults>
</compile_context>

<pallas_src>
import jax
import jax.numpy as jnp
from jax.experimental import pallas as pl
from jax.experimental.pallas import tpu as pltpu

NOISE_SCALE = 0.01


def nfdt_kernel(x_ref, noise_ref, w1_ref, b1_ref, w2_ref, b2_ref, out_ref):
    B, H = out_ref.shape          # static
    CB = x_ref.shape[0]           # static
    C = CB // B                   # static Python int (number of clients)

    # Local models for all clients in one MXU pass: (C*B, Din) @ (Din, H)
    local = jnp.dot(x_ref[...], w1_ref[...],
                    preferred_element_type=jnp.float32) + b1_ref[...]
    noisy = jnp.maximum(local, 0.0) + noise_ref[...] * NOISE_SCALE

    # Client mean: static unrolled sum over C sublane slices of B rows each
    # (B = 8 keeps every slice on a sublane boundary).
    agg = noisy[0:B, :]
    for c in range(1, C):
        agg = agg + noisy[c * B:(c + 1) * B, :]
    agg = agg * (1.0 / C)

    # Global model: (B, H) @ (H, H) -> relu
    glob = jnp.dot(agg, w2_ref[...],
                   preferred_element_type=jnp.float32) + b2_ref[...]
    out_ref[...] = jnp.maximum(glob, 0.0).astype(out_ref.dtype)


def nfdt_forward(distributed_data, w1, b1, w2, b2, noise_key):
    C, B, Din = distributed_data.shape
    H = w1.shape[1]

    x_flat = distributed_data.reshape(C * B, Din)
    # torch.randn_like(local_output) equivalent, drawn once for all clients.
    noise = jax.random.normal(noise_key, (C * B, H), dtype=jnp.float32)

    vmem = pltpu.MemorySpace.VMEM
    return pl.pallas_call(
        nfdt_kernel,
        out_shape=jax.ShapeDtypeStruct((B, H), jnp.float32),
        in_specs=[pl.BlockSpec(memory_space=vmem)] * 6,   # whole arrays, VMEM resident
        out_specs=pl.BlockSpec(memory_space=vmem),
    )(x_flat, noise, w1, b1, w2, b2)


if __name__ == "__main__":
    num_clients, batch, input_dim, hidden_dim = 4, 8, 16, 32

    key = jax.random.PRNGKey(0)
    k_x, k_w1, k_b1, k_w2, k_b2, k_noise = jax.random.split(key, 6)

    # Deterministic synthetic parameters (Linear(input_dim, hidden_dim) and
    # Linear(hidden_dim, hidden_dim)), stored transposed as [in, out].
    distributed_data = jax.random.normal(
        k_x, (num_clients, batch, input_dim), dtype=jnp.float32)
    w1 = jax.random.normal(k_w1, (input_dim, hidden_dim), jnp.float32) * 0.1
    b1 = jax.random.normal(k_b1, (1, hidden_dim), jnp.float32) * 0.1
    w2 = jax.random.normal(k_w2, (hidden_dim, hidden_dim), jnp.float32) * 0.1
    b2 = jax.random.normal(k_b2, (1, hidden_dim), jnp.float32) * 0.1

    out = nfdt_forward(distributed_data, w1, b1, w2, b2, k_noise)
    out = jax.block_until_ready(out)

    # sanity: shape and relu non-negativity
    assert out.shape == (batch, hidden_dim)
    assert bool(jnp.all(out >= 0.0))

    # Tight reference check: the kernel uses the exact same noise draw, so the
    # only differences are matmul precision / reduction order.
    noise = jax.random.normal(
        k_noise, (num_clients * batch, hidden_dim), jnp.float32
    ).reshape(num_clients, batch, hidden_dim)
    local = jnp.maximum(
        jnp.einsum("cbi,ih->cbh", distributed_data, w1) + b1, 0.0)
    noisy = local + noise * NOISE_SCALE
    agg = jnp.mean(noisy, axis=0)
    ref = jnp.maximum(agg @ w2 + b2, 0.0)
    assert float(jnp.max(jnp.abs(out - ref))) < 2e-2

    print("KERNEL_OK")
</pallas_src>

<mosaic_0001>
module attributes {stable_mosaic.version = 11 : i64} {
  func.func @nfdt_kernel(%arg0: memref<32x16xf32, #tpu.memory_space<vmem>>, %arg1: memref<32x32xf32, #tpu.memory_space<vmem>>, %arg2: memref<16x32xf32, #tpu.memory_space<vmem>>, %arg3: memref<1x32xf32, #tpu.memory_space<vmem>>, %arg4: memref<32x32xf32, #tpu.memory_space<vmem>>, %arg5: memref<1x32xf32, #tpu.memory_space<vmem>>, %arg6: memref<8x32xf32, #tpu.memory_space<vmem>>) attributes {dimension_semantics = [], scalar_prefetch = 0 : i64, scratch_operands = 0 : i64, tpu.core_type = #tpu.core_type<tc>} {
    %c0 = arith.constant 0 : index
    %c0_0 = arith.constant 0 : index
    %0 = vector.load %arg0[%c0, %c0_0] : memref<32x16xf32, #tpu.memory_space<vmem>>, vector<32x16xf32>
    %c0_1 = arith.constant 0 : index
    %c0_2 = arith.constant 0 : index
    %1 = vector.load %arg2[%c0_1, %c0_2] : memref<16x32xf32, #tpu.memory_space<vmem>>, vector<16x32xf32>
    %cst = arith.constant dense<0.000000e+00> : vector<32x32xf32>
    %2 = tpu.matmul %0, %1, %cst {dimension_numbers = #tpu.dot_dimension_numbers<[1], [0], [0], [1], [0, 0, 1, 1], [], []>} : vector<32x16xf32>, vector<16x32xf32>, vector<32x32xf32> -> vector<32x32xf32>
    %c0_3 = arith.constant 0 : index
    %c0_4 = arith.constant 0 : index
    %3 = vector.load %arg3[%c0_3, %c0_4] : memref<1x32xf32, #tpu.memory_space<vmem>>, vector<1x32xf32>
    %4 = vector.broadcast %3 : vector<1x32xf32> to vector<32x32xf32>
    %5 = arith.addf %2, %4 : vector<32x32xf32>
    %cst_5 = arith.constant 0.000000e+00 : f32
    %6 = vector.broadcast %cst_5 : f32 to vector<32x32xf32>
    %7 = arith.maximumf %5, %6 : vector<32x32xf32>
    %c0_6 = arith.constant 0 : index
    %c0_7 = arith.constant 0 : index
    %8 = vector.load %arg1[%c0_6, %c0_7] : memref<32x32xf32, #tpu.memory_space<vmem>>, vector<32x32xf32>
    %cst_8 = arith.constant 0.00999999977 : f32
    %9 = vector.broadcast %cst_8 : f32 to vector<32x32xf32>
    %10 = arith.mulf %8, %9 : vector<32x32xf32>
    %11 = arith.addf %7, %10 : vector<32x32xf32>
    %12 = vector.extract_strided_slice %11 {offsets = [0, 0], sizes = [8, 32], strides = [1, 1]} : vector<32x32xf32> to vector<8x32xf32>
    %13 = vector.extract_strided_slice %11 {offsets = [8, 0], sizes = [8, 32], strides = [1, 1]} : vector<32x32xf32> to vector<8x32xf32>
    %14 = arith.addf %12, %13 : vector<8x32xf32>
    %15 = vector.extract_strided_slice %11 {offsets = [16, 0], sizes = [8, 32], strides = [1, 1]} : vector<32x32xf32> to vector<8x32xf32>
    %16 = arith.addf %14, %15 : vector<8x32xf32>
    %17 = vector.extract_strided_slice %11 {offsets = [24, 0], sizes = [8, 32], strides = [1, 1]} : vector<32x32xf32> to vector<8x32xf32>
    %18 = arith.addf %16, %17 : vector<8x32xf32>
    %cst_9 = arith.constant 2.500000e-01 : f32
    %19 = vector.broadcast %cst_9 : f32 to vector<8x32xf32>
    %20 = arith.mulf %18, %19 : vector<8x32xf32>
    %c0_10 = arith.constant 0 : index
    %c0_11 = arith.constant 0 : index
    %21 = vector.load %arg4[%c0_10, %c0_11] : memref<32x32xf32, #tpu.memory_space<vmem>>, vector<32x32xf32>
    %cst_12 = arith.constant dense<0.000000e+00> : vector<8x32xf32>
    %22 = tpu.matmul %20, %21, %cst_12 {dimension_numbers = #tpu.dot_dimension_numbers<[1], [0], [0], [1], [0, 0, 1, 1], [], []>} : vector<8x32xf32>, vector<32x32xf32>, vector<8x32xf32> -> vector<8x32xf32>
    %c0_13 = arith.constant 0 : index
    %c0_14 = arith.constant 0 : index
    %23 = vector.load %arg5[%c0_13, %c0_14] : memref<1x32xf32, #tpu.memory_space<vmem>>, vector<1x32xf32>
    %24 = vector.broadcast %23 : vector<1x32xf32> to vector<8x32xf32>
    %25 = arith.addf %22, %24 : vector<8x32xf32>
    %cst_15 = arith.constant 0.000000e+00 : f32
    %26 = vector.broadcast %cst_15 : f32 to vector<8x32xf32>
    %27 = arith.maximumf %25, %26 : vector<8x32xf32>
    %c0_16 = arith.constant 0 : index
    %c0_17 = arith.constant 0 : index
    %28 = vector.load %arg6[%c0_16, %c0_17] : memref<8x32xf32, #tpu.memory_space<vmem>>, vector<8x32xf32>
    tpu.vector_store %arg6[%c0_16, %c0_17], %27 {strides = array<i32>} : memref<8x32xf32, #tpu.memory_space<vmem>>, vector<8x32xf32>,
    return
  }
}

</mosaic_0001>

<llo_original>
// kernel: tpu_custom_call.1
$region0: #{tpu_custom_call.1}
  #allocation0 [shape = 'u32[]', space=smem, size = 0x4, offset = 0x4, fixed_abs, tag = 'smem constant byte address 0x4 - core index']
  #allocation1 [shape = 'u32[72,128]{1,0:T(1,128)}', space=vmem, size = 0x9000, scoped, tag = 'internal scratch']
  %s0 = inlined_call_operand.vmem [shape: f32[32,16], index: 0, kind: input, shape index: {}]
  %s1 = inlined_call_operand.vmem [shape: f32[32,32], index: 1, kind: input, shape index: {}]
  %s2 = inlined_call_operand.vmem [shape: f32[16,32], index: 2, kind: input, shape index: {}]
  %s3 = inlined_call_operand.vmem [shape: f32[1,32], index: 3, kind: input, shape index: {}]
  %s4 = inlined_call_operand.hbm [shape: f32[32,32], index: 4, kind: input, shape index: {}]
  %s5 = inlined_call_operand.vmem [shape: f32[1,32], index: 5, kind: input, shape index: {}]
  %s6 = inlined_call_operand.hbm [shape: f32[8,32], index: 6, kind: output, shape index: {}]
  %s7 = sld [smem:[#allocation0]]
  $region38: #{tpu_custom_call.1} parent=0
    _
  %s9 = ssub.s32 1, %s7
  %s10 = scalar_select 0, %s9, %s7
  $region1: #{tpu_custom_call.1} parent=0
    #allocation2 [shape = 'u8[16384]{0}', space=vmem, size = 0x4000, scoped, tag = 'input window, operand 4, single buffered']
    #allocation3 [shape = 's32[1]{0}', space=sflag, size = 0x4, scoped, tag = 'scoped memory for tpu_custom_call.1']
    #allocation4 [shape = 's32[1]{0}', space=sflag, size = 0x4, scoped, tag = 'scoped memory for tpu_custom_call.1']
    #allocation5 [shape = 'u8[4096]{0}', space=vmem, size = 0x1000, scoped, tag = 'output window, operand 0, single buffered']
    %11 = vsyncpa [#allocation3], 0
    %12 = vsyncpa [#allocation4], 0
    // Predicated region
    $region2: #{tpu_custom_call.1} parent=1 // pred_check
      _
    $region3: #{tpu_custom_call.1} parent=1 // pred_check_branch
      %14 = sbr.rel (0) target = $region5
    $region4: #{tpu_custom_call.1} parent=1 // pred_region
      _
    $region5: #{tpu_custom_call.1} parent=1 // pred_fallthru
      _
    // Predicated region
    $region6: #{tpu_custom_call.1} parent=1 // pred_check
      _
    $region7: #{tpu_custom_call.1} parent=1 // pred_check_branch
      %16 = sbr.rel (0) target = $region9
    $region8: #{tpu_custom_call.1} parent=1 // pred_region
      _
    $region9: #{tpu_custom_call.1} parent=1 // pred_fallthru
      _
    // Predicated region
    $region10: #{tpu_custom_call.1} parent=1 // pred_check
      _
    $region11: #{tpu_custom_call.1} parent=1 // pred_check_branch
      %18 = sbr.rel (0) target = $region13
    $region12: #{tpu_custom_call.1} parent=1 // pred_region
      _
    $region13: #{tpu_custom_call.1} parent=1 // pred_fallthru
      _
    // Predicated region
    $region14: #{tpu_custom_call.1} parent=1 // pred_check
      _
    $region15: #{tpu_custom_call.1} parent=1 // pred_check_branch
      %20 = sbr.rel (0) target = $region17
    $region16: #{tpu_custom_call.1} parent=1 // pred_region
      _
    $region17: #{tpu_custom_call.1} parent=1 // pred_fallthru
      _
    // Predicated region
    $region18: #{tpu_custom_call.1} parent=1 // pred_check
      _
    $region19: #{tpu_custom_call.1} parent=1 // pred_check_branch
      %22 = sbr.rel (0) target = $region21
    $region20: #{tpu_custom_call.1} parent=1 // pred_region
      %24 = vsyncadd [#allocation3], 0
      %s25 = sshll.u32 %s4, 4
      %s26 = int_to_ptr.hbm [resolvable:$true] %s25
      %s27 = sshll.u32 [#allocation2], 4
      %s28 = int_to_ptr.vmem [resolvable:$true] %s27
      %33 = dma.hbm_to_vmem [thread:$0]  %s26, 512, %s28, [#allocation3], 128, 128, 8
    $region21: #{tpu_custom_call.1} parent=1 // pred_fallthru
      _
    // Predicated region
    $region22: #{tpu_custom_call.1} parent=1 // pred_check
      _
    $region23: #{tpu_custom_call.1} parent=1 // pred_check_branch
      %35 = sbr.rel (0) target = $region25
    $region24: #{tpu_custom_call.1} parent=1 // pred_region
      _
    $region25: #{tpu_custom_call.1} parent=1 // pred_fallthru
      _
    // Predicated region
    $region26: #{tpu_custom_call.1} parent=1 // pred_check
      _
    $region27: #{tpu_custom_call.1} parent=1 // pred_check_branch
      %37 = sbr.rel (0) target = $region29
    $region28: #{tpu_custom_call.1} parent=1 // pred_region
      %39 = dma.done [#allocation3], 512
    $region29: #{tpu_custom_call.1} parent=1 // pred_fallthru
      _
    %v40 = vld [vmem:[%s0] sm:$0xff]
    %v41 = vld [vmem:[%s0 + $0x8] sm:$0xff]
    %v42 = vld [vmem:[%s0 + $0x10] sm:$0xff]
    %v43 = vld [vmem:[%s0 + $0x18] sm:$0xff]
    %v44 = vld [vmem:[%s2] sm:$0xff]
    %v45 = vld [vmem:[%s2 + $0x8] sm:$0xff]
    %v46 = vld [vmem:[%s3] sm:$0x1]
    %v48 = vperm.slane %v46, 0
    %vm50 = vcmask 130048
    %v52 = vsel %vm50, %v40, 0
    %v55 = vsel %vm50, %v41, 0
    %v58 = vsel %vm50, %v42, 0
    %v61 = vsel %vm50, %v43, 0
    %63 = vmatpush.msra.mxu0 0.0
    %64 = vmatpush.msra.mxu0 0.0
    %65 = vmatpush.msra.mxu0 0.0
    %66 = vmatpush.msra.mxu0 0.0
    %67 = vmatpush.msra.mxu0 0.0
    %68 = vmatpush.msra.mxu0 0.0
    %69 = vmatpush.msra.mxu0 0.0
    %70 = vmatpush.msra.mxu0 0.0
    %71 = vmatpush.msra.mxu0 0.0
    %72 = vmatpush.msra.mxu0 0.0
    %73 = vmatpush.msra.mxu0 0.0
    %74 = vmatpush.msra.mxu0 0.0
    %75 = vmatpush.msra.mxu0 0.0
    %76 = vmatpush.msra.mxu0 0.0
    %77 = vmatpush.msra.mxu0 %v45
    %78 = vmatpush.msra.mxu0 %v44
    %79 = vmatmul.f32.gmra.mxu0 %v52
    %v80 = vpop.f32.mrf.mxu0
    %v81 = vadd.f32 %v48, %v80
    %82 = vmatmul.f32.gmra.mxu0 %v55
    %v83 = vpop.f32.mrf.mxu0
    %v84 = vadd.f32 %v48, %v83
    %85 = vmatmul.f32.gmra.mxu0 %v58
    %v86 = vpop.f32.mrf.mxu0
    %v87 = vadd.f32 %v48, %v86
    %88 = vmatmul.f32.gmra.mxu0 %v61
    %v89 = vpop.f32.mrf.mxu0
    %v90 = vadd.f32 %v48, %v89
    %91 = vdwg.mxu0
    %v92 = vmax.f32 %v81, 0.0
    %v93 = vmax.f32 %v84, 0.0
    %v94 = vmax.f32 %v87, 0.0
    %v95 = vmax.f32 %v90, 0.0
    %v96 = vld [vmem:[%s1] sm:$0xff]
    %v97 = vld [vmem:[%s1 + $0x8] sm:$0xff]
    %v98 = vld [vmem:[%s1 + $0x10] sm:$0xff]
    %v99 = vld [vmem:[%s1 + $0x18] sm:$0xff]
    %v100 = vmul.f32 %v96, 0.01
    %v101 = vmul.f32 %v97, 0.01
    %v102 = vmul.f32 %v98, 0.01
    %v103 = vmul.f32 %v99, 0.01
    %v104 = vadd.f32 %v92, %v100
    %v105 = vadd.f32 %v93, %v101
    %v106 = vadd.f32 %v94, %v102
    %v107 = vadd.f32 %v95, %v103
    %v108 = vadd.f32 %v104, %v105
    %v109 = vadd.f32 %v108, %v106
    %v110 = vadd.f32 %v109, %v107
    %v111 = vmul.f32 %v110, 0.25
    %v112 = vld [vmem:[#allocation2] sm:$0xff]
    %v113 = vld [vmem:[#allocation2 + $0x8] sm:$0xff]
    %v114 = vld [vmem:[#allocation2 + $0x10] sm:$0xff]
    %v115 = vld [vmem:[#allocation2 + $0x18] sm:$0xff]
    %v116 = vld [vmem:[%s5] sm:$0x1]
    %v118 = vperm.slane %v116, 0
    %vm120 = vcmask 261120
    %v122 = vsel %vm120, %v111, 0
    %124 = vmatpush.msra.mxu0 0.0
    %125 = vmatpush.msra.mxu0 0.0
    %126 = vmatpush.msra.mxu0 0.0
    %127 = vmatpush.msra.mxu0 0.0
    %128 = vmatpush.msra.mxu0 0.0
    %129 = vmatpush.msra.mxu0 0.0
    %130 = vmatpush.msra.mxu0 0.0
    %131 = vmatpush.msra.mxu0 0.0
    %132 = vmatpush.msra.mxu0 0.0
    %133 = vmatpush.msra.mxu0 0.0
    %134 = vmatpush.msra.mxu0 0.0
    %135 = vmatpush.msra.mxu0 0.0
    %136 = vmatpush.msra.mxu0 %v115
    %137 = vmatpush.msra.mxu0 %v114
    %138 = vmatpush.msra.mxu0 %v113
    %139 = vmatpush.msra.mxu0 %v112
    %140 = vmatmul.f32.gmra.mxu0 %v122
    %v141 = vpop.f32.mrf.mxu0
    %v142 = vadd.f32 %v118, %v141
    %143 = vdwg.mxu0
    %v144 = vmax.f32 %v142, 0.0
    %145 = vst.msk [vmem:[#allocation5] sm:$0xff] %vm120, %v144
    // Predicated region
    $region30: #{tpu_custom_call.1} parent=1 // pred_check
      _
    $region31: #{tpu_custom_call.1} parent=1 // pred_check_branch
      %147 = sbr.rel (0) target = $region33
    $region32: #{tpu_custom_call.1} parent=1 // pred_region
      %149 = vsyncadd [#allocation4], 0
      %s151 = sshll.u32 [#allocation5], 4
      %s152 = int_to_ptr.vmem [resolvable:$true] %s151
      %s153 = sshll.u32 %s6, 4
      %s154 = int_to_ptr.hbm [resolvable:$true] %s153
      %156 = dma.vmem_to_hbm [thread:$0]  %s152, 128, %s154, [#allocation4]
    $region33: #{tpu_custom_call.1} parent=1 // pred_fallthru
      _
    // Predicated region
    $region34: #{tpu_custom_call.1} parent=1 // pred_check
      _
    $region35: #{tpu_custom_call.1} parent=1 // pred_check_branch
      %158 = sbr.rel (0) target = $region37
    $region36: #{tpu_custom_call.1} parent=1 // pred_region
      %160 = dma.done [#allocation4], 128
    $region37: #{tpu_custom_call.1} parent=1 // pred_fallthru
      _
    %161 = vsyncpa [#allocation3], 1
    %162 = vsyncpa [#allocation4], 1

</llo_original>
